<compile_context>
chip_gen: v7x
topology: tpu7x:2x2x1
jax: 0.10.0
libtpu: 0.0.40
codegen_flags: <defaults>
</compile_context>

<pallas_src>
import jax
import jax.numpy as jnp
from jax.experimental import pallas as pl
from jax.experimental.pallas import tpu as pltpu


def _round_up(x, m):
    return (x + m - 1) // m * m


def _physical_vmem_bytes():
    """Per-TensorCore VMEM capacity; conservative 64 MiB (v7x) if unknown."""
    try:
        return int(pltpu.get_tpu_info().vmem_capacity_bytes)
    except Exception:
        return 64 * 1024 * 1024


def _block_invariant_spec(block_shape, single_buffer):
    """BlockSpec for an operand whose block never changes across the grid."""
    index_map = lambda *_: (0,) * len(block_shape)
    if single_buffer:
        # Constant index_map => double-buffering only doubles its VMEM cost.
        return pl.BlockSpec(block_shape, index_map,
                            pipeline_mode=pl.Buffered(1))
    return pl.BlockSpec(block_shape, index_map)


# ----------------------------- kernels --------------------------------------


def jem_kernel(x_ref, w_ref, b_ref, out_ref):
    """Resident-W fast path: logits = x @ W + b, then -logsumexp(axis=1)."""
    logits = jnp.dot(x_ref[...], w_ref[...],
                     preferred_element_type=jnp.float32) + b_ref[...]
    m = jnp.max(logits, axis=1, keepdims=True)
    lse = m + jnp.log(jnp.sum(jnp.exp(logits - m), axis=1, keepdims=True))
    out_ref[...] = -lse


def jem_kernel_dtiled(x_ref, w_ref, b_ref, out_ref, acc_ref):
    """D-tiled fallback: accumulate partial logits, finalize with logsumexp."""
    k = pl.program_id(1)

    @pl.when(k == 0)
    def _():
        acc_ref[...] = jnp.zeros_like(acc_ref)

    acc_ref[...] += jnp.dot(x_ref[...], w_ref[...],
                            preferred_element_type=jnp.float32)

    @pl.when(k == pl.num_programs(1) - 1)
    def _():
        logits = acc_ref[...] + b_ref[...]
        m = jnp.max(logits, axis=1, keepdims=True)
        lse = m + jnp.log(jnp.sum(jnp.exp(logits - m), axis=1, keepdims=True))
        out_ref[...] = -lse


# ----------------------------- wrappers --------------------------------------


def jem_prepare_params(W, b):
    """One-time weight prep (hoisted out of the forward-pass hot path)."""
    D, K = W.shape
    Kp = _round_up(K, 128)
    W_pad = jnp.zeros((D, Kp), jnp.bfloat16).at[:, :K].set(
        W.astype(jnp.bfloat16))
    # Large finite negative (not -inf): exp underflows to exactly 0 for the
    # padded classes without any inf - inf = NaN edge case.
    neg = jnp.finfo(jnp.float32).min / 2
    b_pad = jnp.full((1, Kp), neg, jnp.float32).at[0, :K].set(
        b.astype(jnp.float32))
    return W_pad, b_pad


def _jem_energy_impl(x_nchw, W_pad, b_pad, *, tm, d_tile, single_buffer):
    B = x_nchw.shape[0]
    D, Kp = W_pad.shape

    # --- batch tiling --------------------------------------------------------
    Bp = _round_up(B, 8)
    tm = _round_up(min(tm, Bp), 8)
    if Bp >= 512:
        # Keep >= 2 "parallel" grid steps so both v7x TensorCores get work.
        tm = min(tm, _round_up(Bp // 2, 256))
    Bp = _round_up(Bp, tm)

    x_flat = x_nchw.reshape(B, -1).astype(jnp.bfloat16)
    assert x_flat.shape[1] == D, "flattened input does not match W"

    # --- VMEM-budget-driven structure choice ---------------------------------
    phys = _physical_vmem_bytes()
    budget = phys * 3 // 4                       # headroom for compiler scratch
    w_bufs = 1 if single_buffer else 2
    est = (2 * tm * D * 2                        # x tile, bf16, double-buffered
           + w_bufs * (D * Kp * 2 + Kp * 4)      # resident W (bf16) + bias
           + 2 * tm * 4                          # energy tile, fp32
           + 2 * tm * Kp * 4)                    # fp32 logits intermediates

    if d_tile is None and est <= budget:
        # Fast path: W fully resident, single dot per batch tile.
        if Bp != B:
            x_flat = jnp.pad(x_flat, ((0, Bp - B), (0, 0)))
        grid = (Bp // tm,)
        in_specs = [
            pl.BlockSpec((tm, D), lambda i: (i, 0)),
            _block_invariant_spec((D, Kp), single_buffer),
            _block_invariant_spec((1, Kp), single_buffer),
        ]
        out_specs = pl.BlockSpec((tm, 1), lambda i: (i, 0))
        scratch = ()
        kernel = jem_kernel
        semantics = ("parallel",)
        args = (x_flat, W_pad, b_pad)
    else:
        # Fallback: stream W along a D-reduction grid axis + fp32 accumulator
        # (needed when resident W exceeds the budget, e.g. huge D on v7x).
        if d_tile is not None:
            tk = _round_up(d_tile, 128)
        else:
            fixed = (w_bufs * Kp * 4 + 2 * tm * 4
                     + tm * Kp * 4 + 2 * tm * Kp * 4)
            tk = (budget - fixed) // (4 * (tm + Kp))
            tk = max(128, tk // 128 * 128)
        tk = min(tk, _round_up(D, 128))
        Dp = _round_up(D, tk)

        if Bp != B or Dp != D:
            x_flat = jnp.pad(x_flat, ((0, Bp - B), (0, Dp - D)))
        W_use = W_pad if Dp == D else jnp.pad(W_pad, ((0, Dp - D), (0, 0)))

        grid = (Bp // tm, Dp // tk)              # reduction axis last
        in_specs = [
            pl.BlockSpec((tm, tk), lambda i, k: (i, k)),
            pl.BlockSpec((tk, Kp), lambda i, k: (k, 0)),
            _block_invariant_spec((1, Kp), single_buffer),
        ]
        out_specs = pl.BlockSpec((tm, 1), lambda i, k: (i, 0))
        scratch = (pltpu.VMEM((tm, Kp), jnp.float32),)
        kernel = jem_kernel_dtiled
        semantics = ("parallel", "arbitrary")
        est = (2 * tm * tk * 2 + 2 * tk * Kp * 2 + w_bufs * Kp * 4
               + 2 * tm * 4 + tm * Kp * 4 + 2 * tm * Kp * 4)
        args = (x_flat, W_use, b_pad)

    # Always set the scoped-VMEM limit from the estimate (v5e defaults to only
    # ~16 MiB) but never above physical VMEM (v7x has 64 MiB per TensorCore).
    vmem_limit = int(min(max(est * 3 // 2, 32 * 1024 * 1024), phys * 9 // 10))

    cost = pl.CostEstimate(
        flops=2 * Bp * D * Kp,
        transcendentals=Bp * (Kp + 1),
        bytes_accessed=(args[0].size * 2 + args[1].size * 2
                        + b_pad.size * 4 + Bp * 4),
    )

    out = pl.pallas_call(
        kernel,
        out_shape=jax.ShapeDtypeStruct((Bp, 1), jnp.float32),
        grid_spec=pltpu.PrefetchScalarGridSpec(
            num_scalar_prefetch=0,
            grid=grid,
            in_specs=in_specs,
            out_specs=out_specs,
            scratch_shapes=scratch,
        ),
        compiler_params=pltpu.CompilerParams(
            dimension_semantics=semantics,
            vmem_limit_bytes=vmem_limit,
        ),
        cost_estimate=cost,
    )(*args)
    return out[:B, 0]


def jem_energy(x_nchw, W_pad, b_pad, *, tm=512, d_tile=None):
    """JEM forward: energy(x) = -logsumexp(model(x), axis=1). Returns (B,)."""
    try:
        out = _jem_energy_impl(x_nchw, W_pad, b_pad, tm=tm, d_tile=d_tile,
                               single_buffer=True)
        return jax.block_until_ready(out)
    except Exception:
        # pl.Buffered(1) single-buffering of block-invariant operands is a
        # pure VMEM optimization; retry with default double-buffering if this
        # JAX / libtpu combination rejects pipeline_mode.
        out = _jem_energy_impl(x_nchw, W_pad, b_pad, tm=tm, d_tile=d_tile,
                               single_buffer=False)
        return jax.block_until_ready(out)


def jem_energy_ref(x_nchw, W, b):
    """Pure-JAX fp32 reference matching the PyTorch module."""
    logits = x_nchw.reshape(x_nchw.shape[0], -1).astype(jnp.float32) @ W + b
    return -jax.scipy.special.logsumexp(logits, axis=1)


if __name__ == "__main__":
    # Small shapes consistent with an image-classifier input.
    B, C, H, Wd = 2, 4, 16, 16            # x: (2, 4, 16, 16) NCHW
    num_classes = 10
    D = C * H * Wd                        # 1024

    key = jax.random.PRNGKey(0)
    kx, kw, kb = jax.random.split(key, 3)
    x = jax.random.normal(kx, (B, C, H, Wd), dtype=jnp.float32)
    W = jax.random.normal(kw, (D, num_classes), dtype=jnp.float32) * 0.02
    b = jax.random.normal(kb, (num_classes,), dtype=jnp.float32) * 0.1

    # Weight prep is done once, outside the forward-pass hot path.
    W_pad, b_pad = jem_prepare_params(W, b)
    energy_ref = jem_energy_ref(x, W, b)

    # Fast path (resident W).
    energy = jax.block_until_ready(jem_energy(x, W_pad, b_pad))
    assert energy.shape == (B,)
    assert jnp.allclose(energy, energy_ref, atol=2e-2, rtol=2e-2), (
        energy, energy_ref)

    # Exercise the D-tiled fallback path (used automatically when resident W
    # would not fit the per-generation VMEM budget, e.g. huge D on v7x).
    energy_tiled = jax.block_until_ready(
        jem_energy(x, W_pad, b_pad, d_tile=256))
    assert jnp.allclose(energy_tiled, energy_ref, atol=2e-2, rtol=2e-2), (
        energy_tiled, energy_ref)

    print("KERNEL_OK")
</pallas_src>

<mosaic_0001>
module attributes {stable_mosaic.version = 11 : i64} {
  func.func @jem_kernel(%arg0: i32, %arg1: memref<8x1024xbf16, #tpu.memory_space<vmem>>, %arg2: memref<1024x128xbf16, #tpu.memory_space<vmem>>, %arg3: memref<1x128xf32, #tpu.memory_space<vmem>>, %arg4: memref<8x1xf32, #tpu.memory_space<vmem>>) attributes {dimension_semantics = [#tpu.dimension_semantics<parallel>], iteration_bounds = array<i64: 1>, scalar_prefetch = 0 : i64, scratch_operands = 0 : i64, tpu.core_type = #tpu.core_type<tc>, window_params = [{transform_indices = @transform_0, window_bounds = array<i64: 8, 1024>}, {pipeline_mode = #tpu.pipeline_mode<synchronous>, transform_indices = @transform_1, window_bounds = array<i64: 1024, 128>}, {pipeline_mode = #tpu.pipeline_mode<synchronous>, transform_indices = @transform_2, window_bounds = array<i64: 1, 128>}, {transform_indices = @transform_3, window_bounds = array<i64: 8, 1>}]} {
    %c0 = arith.constant 0 : index
    %c0_0 = arith.constant 0 : index
    %0 = vector.load %arg1[%c0, %c0_0] : memref<8x1024xbf16, #tpu.memory_space<vmem>>, vector<8x1024xbf16>
    %c0_1 = arith.constant 0 : index
    %c0_2 = arith.constant 0 : index
    %1 = vector.load %arg2[%c0_1, %c0_2] : memref<1024x128xbf16, #tpu.memory_space<vmem>>, vector<1024x128xbf16>
    %cst = arith.constant dense<0.000000e+00> : vector<8x128xf32>
    %2 = tpu.matmul %0, %1, %cst {dimension_numbers = #tpu.dot_dimension_numbers<[1], [0], [0], [1], [0, 0, 1, 1], [], []>} : vector<8x1024xbf16>, vector<1024x128xbf16>, vector<8x128xf32> -> vector<8x128xf32>
    %c0_3 = arith.constant 0 : index
    %c0_4 = arith.constant 0 : index
    %3 = vector.load %arg3[%c0_3, %c0_4] : memref<1x128xf32, #tpu.memory_space<vmem>>, vector<1x128xf32>
    %4 = vector.broadcast %3 : vector<1x128xf32> to vector<8x128xf32>
    %5 = arith.addf %2, %4 : vector<8x128xf32>
    %cst_5 = arith.constant dense<0xFF800000> : vector<8xf32>
    %6 = vector.multi_reduction <maximumf>, %5, %cst_5 [1] : vector<8x128xf32> to vector<8xf32>
    %7 = vector.shape_cast %6 : vector<8xf32> to vector<8x1xf32>
    %8 = vector.broadcast %7 : vector<8x1xf32> to vector<8x128xf32>
    %9 = arith.subf %5, %8 : vector<8x128xf32>
    %10 = math.exp %9 : vector<8x128xf32>
    %cst_6 = arith.constant dense<0.000000e+00> : vector<8xf32>
    %11 = vector.multi_reduction <add>, %10, %cst_6 [1] : vector<8x128xf32> to vector<8xf32>
    %12 = vector.shape_cast %11 : vector<8xf32> to vector<8x1xf32>
    %13 = math.log %12 : vector<8x1xf32>
    %14 = arith.addf %7, %13 : vector<8x1xf32>
    %cst_7 = arith.constant 0.000000e+00 : f32
    %15 = vector.broadcast %cst_7 : f32 to vector<8x1xf32>
    %16 = arith.subf %15, %14 : vector<8x1xf32>
    %c0_8 = arith.constant 0 : index
    %c0_9 = arith.constant 0 : index
    %17 = vector.load %arg4[%c0_8, %c0_9] : memref<8x1xf32, #tpu.memory_space<vmem>>, vector<8x1xf32>
    tpu.vector_store %arg4[%c0_8, %c0_9], %16 {strides = array<i32>} : memref<8x1xf32, #tpu.memory_space<vmem>>, vector<8x1xf32>,
    return
  }
  func.func @transform_0(%arg0: i32) -> (i32, i32) {
    %c0_i32 = arith.constant 0 : i32
    %c0_i32_0 = arith.constant 0 : i32
    return %arg0, %c0_i32 : i32, i32
  }
  func.func @transform_1(%arg0: i32) -> (i32, i32) {
    %c0_i32 = arith.constant 0 : i32
    %c0_i32_0 = arith.constant 0 : i32
    %c0_i32_1 = arith.constant 0 : i32
    return %c0_i32, %c0_i32_0 : i32, i32
  }
  func.func @transform_2(%arg0: i32) -> (i32, i32) {
    %c0_i32 = arith.constant 0 : i32
    %c0_i32_0 = arith.constant 0 : i32
    %c0_i32_1 = arith.constant 0 : i32
    return %c0_i32, %c0_i32_0 : i32, i32
  }
  func.func @transform_3(%arg0: i32) -> (i32, i32) {
    %c0_i32 = arith.constant 0 : i32
    %c0_i32_0 = arith.constant 0 : i32
    return %arg0, %c0_i32 : i32, i32
  }
}

module attributes {stable_mosaic.version = 11 : i64} {
  func.func @jem_kernel(%arg0: i32, %arg1: memref<8x1024xbf16, #tpu.memory_space<vmem>>, %arg2: memref<1024x128xbf16, #tpu.memory_space<vmem>>, %arg3: memref<1x128xf32, #tpu.memory_space<vmem>>, %arg4: memref<8x1xf32, #tpu.memory_space<vmem>>) attributes {dimension_semantics = [#tpu.dimension_semantics<parallel>], iteration_bounds = array<i64: 1>, scalar_prefetch = 0 : i64, scratch_operands = 0 : i64, tpu.core_type = #tpu.core_type<tc>, window_params = [{transform_indices = @transform_0, window_bounds = array<i64: 8, 1024>}, {pipeline_mode = #tpu.pipeline_mode<synchronous>, transform_indices = @transform_1, window_bounds = array<i64: 1024, 128>}, {pipeline_mode = #tpu.pipeline_mode<synchronous>, transform_indices = @transform_2, window_bounds = array<i64: 1, 128>}, {transform_indices = @transform_3, window_bounds = array<i64: 8, 1>}]} {
    %c0 = arith.constant 0 : index
    %c0_0 = arith.constant 0 : index
    %0 = vector.load %arg1[%c0, %c0_0] : memref<8x1024xbf16, #tpu.memory_space<vmem>>, vector<8x1024xbf16>
    %c0_1 = arith.constant 0 : index
    %c0_2 = arith.constant 0 : index
    %1 = vector.load %arg2[%c0_1, %c0_2] : memref<1024x128xbf16, #tpu.memory_space<vmem>>, vector<1024x128xbf16>
    %cst = arith.constant dense<0.000000e+00> : vector<8x128xf32>
    %2 = tpu.matmul %0, %1, %cst {dimension_numbers = #tpu.dot_dimension_numbers<[1], [0], [0], [1], [0, 0, 1, 1], [], []>} : vector<8x1024xbf16>, vector<1024x128xbf16>, vector<8x128xf32> -> vector<8x128xf32>
    %c0_3 = arith.constant 0 : index
    %c0_4 = arith.constant 0 : index
    %3 = vector.load %arg3[%c0_3, %c0_4] : memref<1x128xf32, #tpu.memory_space<vmem>>, vector<1x128xf32>
    %4 = vector.broadcast %3 : vector<1x128xf32> to vector<8x128xf32>
    %5 = arith.addf %2, %4 : vector<8x128xf32>
    %cst_5 = arith.constant dense<0xFF800000> : vector<8xf32>
    %6 = vector.multi_reduction <maximumf>, %5, %cst_5 [1] : vector<8x128xf32> to vector<8xf32>
    %7 = vector.shape_cast %6 : vector<8xf32> to vector<8x1xf32>
    %8 = vector.broadcast %7 : vector<8x1xf32> to vector<8x128xf32>
    %9 = arith.subf %5, %8 : vector<8x128xf32>
    %10 = math.exp %9 : vector<8x128xf32>
    %cst_6 = arith.constant dense<0.000000e+00> : vector<8xf32>
    %11 = vector.multi_reduction <add>, %10, %cst_6 [1] : vector<8x128xf32> to vector<8xf32>
    %12 = vector.shape_cast %11 : vector<8xf32> to vector<8x1xf32>
    %13 = math.log %12 : vector<8x1xf32>
    %14 = arith.addf %7, %13 : vector<8x1xf32>
    %cst_7 = arith.constant 0.000000e+00 : f32
    %15 = vector.broadcast %cst_7 : f32 to vector<8x1xf32>
    %16 = arith.subf %15, %14 : vector<8x1xf32>
    %c0_8 = arith.constant 0 : index
    %c0_9 = arith.constant 0 : index
    %17 = vector.load %arg4[%c0_8, %c0_9] : memref<8x1xf32, #tpu.memory_space<vmem>>, vector<8x1xf32>
    tpu.vector_store %arg4[%c0_8, %c0_9], %16 {strides = array<i32>} : memref<8x1xf32, #tpu.memory_space<vmem>>, vector<8x1xf32>,
    return
  }
  func.func @transform_0(%arg0: i32) -> (i32, i32) {
    %c0_i32 = arith.constant 0 : i32
    %c0_i32_0 = arith.constant 0 : i32
    return %arg0, %c0_i32 : i32, i32
  }
  func.func @transform_1(%arg0: i32) -> (i32, i32) {
    %c0_i32 = arith.constant 0 : i32
    %c0_i32_0 = arith.constant 0 : i32
    %c0_i32_1 = arith.constant 0 : i32
    return %c0_i32, %c0_i32_0 : i32, i32
  }
  func.func @transform_2(%arg0: i32) -> (i32, i32) {
    %c0_i32 = arith.constant 0 : i32
    %c0_i32_0 = arith.constant 0 : i32
    %c0_i32_1 = arith.constant 0 : i32
    return %c0_i32, %c0_i32_0 : i32, i32
  }
  func.func @transform_3(%arg0: i32) -> (i32, i32) {
    %c0_i32 = arith.constant 0 : i32
    %c0_i32_0 = arith.constant 0 : i32
    return %arg0, %c0_i32 : i32, i32
  }
}

</mosaic_0001>

<llo_original>
// kernel: tpu_custom_call.1
$region0: #{tpu_custom_call.1}
  #allocation0 [shape = 'u32[]', space=smem, size = 0x4, offset = 0x4, fixed_abs, tag = 'smem constant byte address 0x4 - core index']
  #allocation1 [shape = 'u32[144,128]{1,0:T(1,128)}', space=vmem, size = 0x12000, scoped, tag = 'internal scratch']
  %s0 = inlined_call_operand.hbm [shape: bf16[8,1024], index: 0, kind: input, shape index: {}]
  %s1 = inlined_call_operand.hbm [shape: bf16[1024,128], index: 1, kind: input, shape index: {}]
  %s2 = inlined_call_operand.vmem [shape: f32[1,128], index: 2, kind: input, shape index: {}]
  %s3 = inlined_call_operand.vmem [shape: f32[8,1], index: 3, kind: output, shape index: {}]
  %s4 = sld [smem:[#allocation0]]
  $region30: #{tpu_custom_call.1} parent=0
    _
  %s6 = ssub.s32 1, %s4
  %s7 = scalar_select 0, %s6, %s4
  $region1: #{tpu_custom_call.1} parent=0
    #allocation2 [shape = 'u8[16384]{0}', space=vmem, size = 0x4000, scoped, tag = 'input window, operand 0, single buffered']
    #allocation3 [shape = 's32[1]{0}', space=sflag, size = 0x4, scoped, tag = 'scoped memory for tpu_custom_call.1']
    #allocation4 [shape = 'u8[262144]{0}', space=vmem, size = 0x40000, scoped, tag = 'input window, operand 1, single buffered']
    #allocation5 [shape = 's32[1]{0}', space=sflag, size = 0x4, scoped, tag = 'scoped memory for tpu_custom_call.1']
    %8 = vsyncpa [#allocation3], 0
    %9 = vsyncpa [#allocation5], 0
    // Predicated region
    $region2: #{tpu_custom_call.1} parent=1 // pred_check
      _
    $region3: #{tpu_custom_call.1} parent=1 // pred_check_branch
      %11 = sbr.rel (0) target = $region5
    $region4: #{tpu_custom_call.1} parent=1 // pred_region
      %s13 = ssub.s32 512, 512
      %14 = vsyncadd [#allocation3], %s13
      %s16 = sshll.u32 [#allocation2], 4
      %s17 = int_to_ptr.vmem [resolvable:$true] %s16
      %19 = dma.hbm_to_vmem [thread:$0]  %s0, 512, %s17, [#allocation3]
    $region5: #{tpu_custom_call.1} parent=1 // pred_fallthru
      _
    // Predicated region
    $region6: #{tpu_custom_call.1} parent=1 // pred_check
      _
    $region7: #{tpu_custom_call.1} parent=1 // pred_check_branch
      %21 = sbr.rel (0) target = $region9
    $region8: #{tpu_custom_call.1} parent=1 // pred_region
      %s23 = ssub.s32 8192, 8192
      %24 = vsyncadd [#allocation5], %s23
      %s25 = sshll.u32 [#allocation4], 4
      %s26 = int_to_ptr.vmem [resolvable:$true] %s25
      %31 = dma.hbm_to_vmem [thread:$0]  %s1, 8192, %s26, [#allocation5], 64, 64, 4
    $region9: #{tpu_custom_call.1} parent=1 // pred_fallthru
      _
    // Predicated region
    $region10: #{tpu_custom_call.1} parent=1 // pred_check
      _
    $region11: #{tpu_custom_call.1} parent=1 // pred_check_branch
      %33 = sbr.rel (0) target = $region13
    $region12: #{tpu_custom_call.1} parent=1 // pred_region
      _
    $region13: #{tpu_custom_call.1} parent=1 // pred_fallthru
      _
    // Predicated region
    $region14: #{tpu_custom_call.1} parent=1 // pred_check
      _
    $region15: #{tpu_custom_call.1} parent=1 // pred_check_branch
      %35 = sbr.rel (0) target = $region17
    $region16: #{tpu_custom_call.1} parent=1 // pred_region
      %36 = dma.done [#allocation3], 512
    $region17: #{tpu_custom_call.1} parent=1 // pred_fallthru
      _
    // Predicated region
    $region18: #{tpu_custom_call.1} parent=1 // pred_check
      _
    $region19: #{tpu_custom_call.1} parent=1 // pred_check_branch
      %38 = sbr.rel (0) target = $region21
    $region20: #{tpu_custom_call.1} parent=1 // pred_region
      %39 = dma.done [#allocation5], 8192
    $region21: #{tpu_custom_call.1} parent=1 // pred_fallthru
      _
    %v41 = vld [vmem:[#allocation2] sm:$0xff]
    %v42 = vld [vmem:[#allocation2 + $0x8] sm:$0xff]
    %v43 = vld [vmem:[#allocation2 + $0x10] sm:$0xff]
    %v44 = vld [vmem:[#allocation2 + $0x18] sm:$0xff]
    %v45 = vld [vmem:[#allocation4] sm:$0xf]
    %v46 = vld [vmem:[#allocation4 + $0x4] sm:$0xf]
    %v47 = vld [vmem:[#allocation4 + $0x8] sm:$0xf]
    %v48 = vld [vmem:[#allocation4 + $0xc] sm:$0xf]
    %v49 = vld [vmem:[#allocation4 + $0x10] sm:$0xf]
    %v50 = vld [vmem:[#allocation4 + $0x14] sm:$0xf]
    %v51 = vld [vmem:[#allocation4 + $0x18] sm:$0xf]
    %v52 = vld [vmem:[#allocation4 + $0x1c] sm:$0xf]
    %v53 = vld [vmem:[#allocation4 + $0x20] sm:$0xf]
    %v54 = vld [vmem:[#allocation4 + $0x24] sm:$0xf]
    %v55 = vld [vmem:[#allocation4 + $0x28] sm:$0xf]
    %v56 = vld [vmem:[#allocation4 + $0x2c] sm:$0xf]
    %v57 = vld [vmem:[#allocation4 + $0x30] sm:$0xf]
    %v58 = vld [vmem:[#allocation4 + $0x34] sm:$0xf]
    %v59 = vld [vmem:[#allocation4 + $0x38] sm:$0xf]
    %v60 = vld [vmem:[#allocation4 + $0x3c] sm:$0xf]
    %v61 = vld [vmem:[#allocation4 + $0x40] sm:$0xf]
    %v62 = vld [vmem:[#allocation4 + $0x44] sm:$0xf]
    %v63 = vld [vmem:[#allocation4 + $0x48] sm:$0xf]
    %v64 = vld [vmem:[#allocation4 + $0x4c] sm:$0xf]
    %v65 = vld [vmem:[#allocation4 + $0x50] sm:$0xf]
    %v66 = vld [vmem:[#allocation4 + $0x54] sm:$0xf]
    %v67 = vld [vmem:[#allocation4 + $0x58] sm:$0xf]
    %v68 = vld [vmem:[#allocation4 + $0x5c] sm:$0xf]
    %v69 = vld [vmem:[#allocation4 + $0x60] sm:$0xf]
    %v70 = vld [vmem:[#allocation4 + $0x64] sm:$0xf]
    %v71 = vld [vmem:[#allocation4 + $0x68] sm:$0xf]
    %v72 = vld [vmem:[#allocation4 + $0x6c] sm:$0xf]
    %v73 = vld [vmem:[#allocation4 + $0x70] sm:$0xf]
    %v74 = vld [vmem:[#allocation4 + $0x74] sm:$0xf]
    %v75 = vld [vmem:[#allocation4 + $0x78] sm:$0xf]
    %v76 = vld [vmem:[#allocation4 + $0x7c] sm:$0xf]
    %v77 = vld [vmem:[#allocation4 + $0x80] sm:$0xf]
    %v78 = vld [vmem:[#allocation4 + $0x84] sm:$0xf]
    %v79 = vld [vmem:[#allocation4 + $0x88] sm:$0xf]
    %v80 = vld [vmem:[#allocation4 + $0x8c] sm:$0xf]
    %v81 = vld [vmem:[#allocation4 + $0x90] sm:$0xf]
    %v82 = vld [vmem:[#allocation4 + $0x94] sm:$0xf]
    %v83 = vld [vmem:[#allocation4 + $0x98] sm:$0xf]
    %v84 = vld [vmem:[#allocation4 + $0x9c] sm:$0xf]
    %v85 = vld [vmem:[#allocation4 + $0xa0] sm:$0xf]
    %v86 = vld [vmem:[#allocation4 + $0xa4] sm:$0xf]
    %v87 = vld [vmem:[#allocation4 + $0xa8] sm:$0xf]
    %v88 = vld [vmem:[#allocation4 + $0xac] sm:$0xf]
    %v89 = vld [vmem:[#allocation4 + $0xb0] sm:$0xf]
    %v90 = vld [vmem:[#allocation4 + $0xb4] sm:$0xf]
    %v91 = vld [vmem:[#allocation4 + $0xb8] sm:$0xf]
    %v92 = vld [vmem:[#allocation4 + $0xbc] sm:$0xf]
    %v93 = vld [vmem:[#allocation4 + $0xc0] sm:$0xf]
    %v94 = vld [vmem:[#allocation4 + $0xc4] sm:$0xf]
    %v95 = vld [vmem:[#allocation4 + $0xc8] sm:$0xf]
    %v96 = vld [vmem:[#allocation4 + $0xcc] sm:$0xf]
    %v97 = vld [vmem:[#allocation4 + $0xd0] sm:$0xf]
    %v98 = vld [vmem:[#allocation4 + $0xd4] sm:$0xf]
    %v99 = vld [vmem:[#allocation4 + $0xd8] sm:$0xf]
    %v100 = vld [vmem:[#allocation4 + $0xdc] sm:$0xf]
    %v101 = vld [vmem:[#allocation4 + $0xe0] sm:$0xf]
    %v102 = vld [vmem:[#allocation4 + $0xe4] sm:$0xf]
    %v103 = vld [vmem:[#allocation4 + $0xe8] sm:$0xf]
    %v104 = vld [vmem:[#allocation4 + $0xec] sm:$0xf]
    %v105 = vld [vmem:[#allocation4 + $0xf0] sm:$0xf]
    %v106 = vld [vmem:[#allocation4 + $0xf4] sm:$0xf]
    %v107 = vld [vmem:[#allocation4 + $0xf8] sm:$0xf]
    %v108 = vld [vmem:[#allocation4 + $0xfc] sm:$0xf]
    %v109 = vld [vmem:[#allocation4 + $0x100] sm:$0xf]
    %v110 = vld [vmem:[#allocation4 + $0x104] sm:$0xf]
    %v111 = vld [vmem:[#allocation4 + $0x108] sm:$0xf]
    %v112 = vld [vmem:[#allocation4 + $0x10c] sm:$0xf]
    %v113 = vld [vmem:[#allocation4 + $0x110] sm:$0xf]
    %v114 = vld [vmem:[#allocation4 + $0x114] sm:$0xf]
    %v115 = vld [vmem:[#allocation4 + $0x118] sm:$0xf]
    %v116 = vld [vmem:[#allocation4 + $0x11c] sm:$0xf]
    %v117 = vld [vmem:[#allocation4 + $0x120] sm:$0xf]
    %v118 = vld [vmem:[#allocation4 + $0x124] sm:$0xf]
    %v119 = vld [vmem:[#allocation4 + $0x128] sm:$0xf]
    %v120 = vld [vmem:[#allocation4 + $0x12c] sm:$0xf]
    %v121 = vld [vmem:[#allocation4 + $0x130] sm:$0xf]
    %v122 = vld [vmem:[#allocation4 + $0x134] sm:$0xf]
    %v123 = vld [vmem:[#allocation4 + $0x138] sm:$0xf]
    %v124 = vld [vmem:[#allocation4 + $0x13c] sm:$0xf]
    %v125 = vld [vmem:[#allocation4 + $0x140] sm:$0xf]
    %v126 = vld [vmem:[#allocation4 + $0x144] sm:$0xf]
    %v127 = vld [vmem:[#allocation4 + $0x148] sm:$0xf]
    %v128 = vld [vmem:[#allocation4 + $0x14c] sm:$0xf]
    %v129 = vld [vmem:[#allocation4 + $0x150] sm:$0xf]
    %v130 = vld [vmem:[#allocation4 + $0x154] sm:$0xf]
    %v131 = vld [vmem:[#allocation4 + $0x158] sm:$0xf]
    %v132 = vld [vmem:[#allocation4 + $0x15c] sm:$0xf]
    %v133 = vld [vmem:[#allocation4 + $0x160] sm:$0xf]
    %v134 = vld [vmem:[#allocation4 + $0x164] sm:$0xf]
    %v135 = vld [vmem:[#allocation4 + $0x168] sm:$0xf]
    %v136 = vld [vmem:[#allocation4 + $0x16c] sm:$0xf]
    %v137 = vld [vmem:[#allocation4 + $0x170] sm:$0xf]
    %v138 = vld [vmem:[#allocation4 + $0x174] sm:$0xf]
    %v139 = vld [vmem:[#allocation4 + $0x178] sm:$0xf]
    %v140 = vld [vmem:[#allocation4 + $0x17c] sm:$0xf]
    %v141 = vld [vmem:[#allocation4 + $0x180] sm:$0xf]
    %v142 = vld [vmem:[#allocation4 + $0x184] sm:$0xf]
    %v143 = vld [vmem:[#allocation4 + $0x188] sm:$0xf]
    %v144 = vld [vmem:[#allocation4 + $0x18c] sm:$0xf]
    %v145 = vld [vmem:[#allocation4 + $0x190] sm:$0xf]
    %v146 = vld [vmem:[#allocation4 + $0x194] sm:$0xf]
    %v147 = vld [vmem:[#allocation4 + $0x198] sm:$0xf]
    %v148 = vld [vmem:[#allocation4 + $0x19c] sm:$0xf]
    %v149 = vld [vmem:[#allocation4 + $0x1a0] sm:$0xf]
    %v150 = vld [vmem:[#allocation4 + $0x1a4] sm:$0xf]
    %v151 = vld [vmem:[#allocation4 + $0x1a8] sm:$0xf]
    %v152 = vld [vmem:[#allocation4 + $0x1ac] sm:$0xf]
    %v153 = vld [vmem:[#allocation4 + $0x1b0] sm:$0xf]
    %v154 = vld [vmem:[#allocation4 + $0x1b4] sm:$0xf]
    %v155 = vld [vmem:[#allocation4 + $0x1b8] sm:$0xf]
    %v156 = vld [vmem:[#allocation4 + $0x1bc] sm:$0xf]
    %v157 = vld [vmem:[#allocation4 + $0x1c0] sm:$0xf]
    %v158 = vld [vmem:[#allocation4 + $0x1c4] sm:$0xf]
    %v159 = vld [vmem:[#allocation4 + $0x1c8] sm:$0xf]
    %v160 = vld [vmem:[#allocation4 + $0x1cc] sm:$0xf]
    %v161 = vld [vmem:[#allocation4 + $0x1d0] sm:$0xf]
    %v162 = vld [vmem:[#allocation4 + $0x1d4] sm:$0xf]
    %v163 = vld [vmem:[#allocation4 + $0x1d8] sm:$0xf]
    %v164 = vld [vmem:[#allocation4 + $0x1dc] sm:$0xf]
    %v165 = vld [vmem:[#allocation4 + $0x1e0] sm:$0xf]
    %v166 = vld [vmem:[#allocation4 + $0x1e4] sm:$0xf]
    %v167 = vld [vmem:[#allocation4 + $0x1e8] sm:$0xf]
    %v168 = vld [vmem:[#allocation4 + $0x1ec] sm:$0xf]
    %v169 = vld [vmem:[#allocation4 + $0x1f0] sm:$0xf]
    %v170 = vld [vmem:[#allocation4 + $0x1f4] sm:$0xf]
    %v171 = vld [vmem:[#allocation4 + $0x1f8] sm:$0xf]
    %v172 = vld [vmem:[#allocation4 + $0x1fc] sm:$0xf]
    %v173 = vld [vmem:[%s2] sm:$0x1]
    %v175 = vlaneseq
    %v176 = vshrl.u32 %v175, 7
    %v177 = vsub.s32 0, %v176
    %v178 = vrot.slane %v173, %v177
    %v184 = vunpack.c.l.b16 %v41
    %v185 = vunpack.c.h.b16 %v41
    %v186 = vunpack.c.l.b16 %v42
    %v187 = vunpack.c.h.b16 %v42
    %v188 = vunpack.c.l.b16 %v43
    %v189 = vunpack.c.h.b16 %v43
    %v190 = vunpack.c.l.b16 %v44
    %v191 = vunpack.c.h.b16 %v44
    %v192 = vpack.c.b16 %v184, %v184
    %v193 = vpack.c.b16 %v185, %v185
    %v194 = vpack.c.b16 %v186, %v186
    %v195 = vpack.c.b16 %v187, %v187
    %v196 = vpack.c.b16 %v188, %v188
    %v197 = vpack.c.b16 %v189, %v189
    %v198 = vpack.c.b16 %v190, %v190
    %v199 = vpack.c.b16 %v191, %v191
    %v336 = vunpack.c.l.b16 %v45
    %v337 = vunpack.c.l.b16 %v46
    %v338 = vunpack.c.l.b16 %v47
    %v339 = vunpack.c.l.b16 %v48
    %v340 = vunpack.c.l.b16 %v49
    %v341 = vunpack.c.l.b16 %v50
    %v342 = vunpack.c.l.b16 %v51
    %v343 = vunpack.c.l.b16 %v52
    %v344 = vunpack.c.l.b16 %v53
    %v345 = vunpack.c.l.b16 %v54
    %v346 = vunpack.c.l.b16 %v55
    %v347 = vunpack.c.l.b16 %v56
    %v348 = vunpack.c.l.b16 %v57
    %v349 = vunpack.c.l.b16 %v58
    %v350 = vunpack.c.l.b16 %v59
    %v351 = vunpack.c.l.b16 %v60
    %v352 = vunpack.c.l.b16 %v61
    %v353 = vunpack.c.l.b16 %v62
    %v354 = vunpack.c.l.b16 %v63
    %v355 = vunpack.c.l.b16 %v64
    %v356 = vunpack.c.l.b16 %v65
    %v357 = vunpack.c.l.b16 %v66
    %v358 = vunpack.c.l.b16 %v67
    %v359 = vunpack.c.l.b16 %v68
    %v360 = vunpack.c.l.b16 %v69
    %v361 = vunpack.c.l.b16 %v70
    %v362 = vunpack.c.l.b16 %v71
    %v363 = vunpack.c.l.b16 %v72
    %v364 = vunpack.c.l.b16 %v73
    %v365 = vunpack.c.l.b16 %v74
    %v366 = vunpack.c.l.b16 %v75
    %v367 = vunpack.c.l.b16 %v76
    %v368 = vunpack.c.l.b16 %v77
    %v369 = vunpack.c.l.b16 %v78
    %v370 = vunpack.c.l.b16 %v79
    %v371 = vunpack.c.l.b16 %v80
    %v372 = vunpack.c.l.b16 %v81
    %v373 = vunpack.c.l.b16 %v82
    %v374 = vunpack.c.l.b16 %v83
    %v375 = vunpack.c.l.b16 %v84
    %v376 = vunpack.c.l.b16 %v85
    %v377 = vunpack.c.l.b16 %v86
    %v378 = vunpack.c.l.b16 %v87
    %v379 = vunpack.c.l.b16 %v88
    %v380 = vunpack.c.l.b16 %v89
    %v381 = vunpack.c.l.b16 %v90
    %v382 = vunpack.c.l.b16 %v91
    %v383 = vunpack.c.l.b16 %v92
    %v384 = vunpack.c.l.b16 %v93
    %v385 = vunpack.c.l.b16 %v94
    %v386 = vunpack.c.l.b16 %v95
    %v387 = vunpack.c.l.b16 %v96
    %v388 = vunpack.c.l.b16 %v97
    %v389 = vunpack.c.l.b16 %v98
    %v390 = vunpack.c.l.b16 %v99
    %v391 = vunpack.c.l.b16 %v100
    %v392 = vunpack.c.l.b16 %v101
    %v393 = vunpack.c.l.b16 %v102
    %v394 = vunpack.c.l.b16 %v103
    %v395 = vunpack.c.l.b16 %v104
    %v396 = vunpack.c.l.b16 %v105
    %v397 = vunpack.c.l.b16 %v106
    %v398 = vunpack.c.l.b16 %v107
    %v399 = vunpack.c.l.b16 %v108
    %v400 = vunpack.c.l.b16 %v109
    %v401 = vunpack.c.l.b16 %v110
    %v402 = vunpack.c.l.b16 %v111
    %v403 = vunpack.c.l.b16 %v112
    %v404 = vunpack.c.l.b16 %v113
    %v405 = vunpack.c.l.b16 %v114
    %v406 = vunpack.c.l.b16 %v115
    %v407 = vunpack.c.l.b16 %v116
    %v408 = vunpack.c.l.b16 %v117
    %v409 = vunpack.c.l.b16 %v118
    %v410 = vunpack.c.l.b16 %v119
    %v411 = vunpack.c.l.b16 %v120
    %v412 = vunpack.c.l.b16 %v121
    %v413 = vunpack.c.l.b16 %v122
    %v414 = vunpack.c.l.b16 %v123
    %v415 = vunpack.c.l.b16 %v124
    %v416 = vunpack.c.l.b16 %v125
    %v417 = vunpack.c.l.b16 %v126
    %v418 = vunpack.c.l.b16 %v127
    %v419 = vunpack.c.l.b16 %v128
    %v420 = vunpack.c.l.b16 %v129
    %v421 = vunpack.c.l.b16 %v130
    %v422 = vunpack.c.l.b16 %v131
    %v423 = vunpack.c.l.b16 %v132
    %v424 = vunpack.c.l.b16 %v133
    %v425 = vunpack.c.l.b16 %v134
    %v426 = vunpack.c.l.b16 %v135
    %v427 = vunpack.c.l.b16 %v136
    %v428 = vunpack.c.l.b16 %v137
    %v429 = vunpack.c.l.b16 %v138
    %v430 = vunpack.c.l.b16 %v139
    %v431 = vunpack.c.l.b16 %v140
    %v432 = vunpack.c.l.b16 %v141
    %v433 = vunpack.c.l.b16 %v142
    %v434 = vunpack.c.l.b16 %v143
    %v435 = vunpack.c.l.b16 %v144
    %v436 = vunpack.c.l.b16 %v145
    %v437 = vunpack.c.l.b16 %v146
    %v438 = vunpack.c.l.b16 %v147
    %v439 = vunpack.c.l.b16 %v148
    %v440 = vunpack.c.l.b16 %v149
    %v441 = vunpack.c.l.b16 %v150
    %v442 = vunpack.c.l.b16 %v151
    %v443 = vunpack.c.l.b16 %v152
    %v444 = vunpack.c.l.b16 %v153
    %v445 = vunpack.c.l.b16 %v154
    %v446 = vunpack.c.l.b16 %v155
    %v447 = vunpack.c.l.b16 %v156
    %v448 = vunpack.c.l.b16 %v157
    %v449 = vunpack.c.l.b16 %v158
    %v450 = vunpack.c.l.b16 %v159
    %v451 = vunpack.c.l.b16 %v160
    %v452 = vunpack.c.l.b16 %v161
    %v453 = vunpack.c.l.b16 %v162
    %v454 = vunpack.c.l.b16 %v163
    %v455 = vunpack.c.l.b16 %v164
    %v456 = vunpack.c.l.b16 %v165
    %v457 = vunpack.c.l.b16 %v166
    %v458 = vunpack.c.l.b16 %v167
    %v459 = vunpack.c.l.b16 %v168
    %v460 = vunpack.c.l.b16 %v169
    %v461 = vunpack.c.l.b16 %v170
    %v462 = vunpack.c.l.b16 %v171
    %v463 = vunpack.c.l.b16 %v172
    %v464 = vpack.c.b16 %v337, %v336
    %v465 = vpack.c.b16 %v339, %v338
    %v466 = vpack.c.b16 %v341, %v340
    %v467 = vpack.c.b16 %v343, %v342
    %v468 = vpack.c.b16 %v345, %v344
    %v469 = vpack.c.b16 %v347, %v346
    %v470 = vpack.c.b16 %v349, %v348
    %v471 = vpack.c.b16 %v351, %v350
    %v472 = vpack.c.b16 %v353, %v352
    %v473 = vpack.c.b16 %v355, %v354
    %v474 = vpack.c.b16 %v357, %v356
    %v475 = vpack.c.b16 %v359, %v358
    %v476 = vpack.c.b16 %v361, %v360
    %v477 = vpack.c.b16 %v363, %v362
    %v478 = vpack.c.b16 %v365, %v364
    %v479 = vpack.c.b16 %v367, %v366
    %v480 = vpack.c.b16 %v369, %v368
    %v481 = vpack.c.b16 %v371, %v370
    %v482 = vpack.c.b16 %v373, %v372
    %v483 = vpack.c.b16 %v375, %v374
    %v484 = vpack.c.b16 %v377, %v376
    %v485 = vpack.c.b16 %v379, %v378
    %v486 = vpack.c.b16 %v381, %v380
    %v487 = vpack.c.b16 %v383, %v382
    %v488 = vpack.c.b16 %v385, %v384
    %v489 = vpack.c.b16 %v387, %v386
    %v490 = vpack.c.b16 %v389, %v388
    %v491 = vpack.c.b16 %v391, %v390
    %v492 = vpack.c.b16 %v393, %v392
    %v493 = vpack.c.b16 %v395, %v394
    %v494 = vpack.c.b16 %v397, %v396
    %v495 = vpack.c.b16 %v399, %v398
    %v496 = vpack.c.b16 %v401, %v400
    %v497 = vpack.c.b16 %v403, %v402
    %v498 = vpack.c.b16 %v405, %v404
    %v499 = vpack.c.b16 %v407, %v406
    %v500 = vpack.c.b16 %v409, %v408
    %v501 = vpack.c.b16 %v411, %v410
    %v502 = vpack.c.b16 %v413, %v412
    %v503 = vpack.c.b16 %v415, %v414
    %v504 = vpack.c.b16 %v417, %v416
    %v505 = vpack.c.b16 %v419, %v418
    %v506 = vpack.c.b16 %v421, %v420
    %v507 = vpack.c.b16 %v423, %v422
    %v508 = vpack.c.b16 %v425, %v424
    %v509 = vpack.c.b16 %v427, %v426
    %v510 = vpack.c.b16 %v429, %v428
    %v511 = vpack.c.b16 %v431, %v430
    %v512 = vpack.c.b16 %v433, %v432
    %v513 = vpack.c.b16 %v435, %v434
    %v514 = vpack.c.b16 %v437, %v436
    %v515 = vpack.c.b16 %v439, %v438
    %v516 = vpack.c.b16 %v441, %v440
    %v517 = vpack.c.b16 %v443, %v442
    %v518 = vpack.c.b16 %v445, %v444
    %v519 = vpack.c.b16 %v447, %v446
    %v520 = vpack.c.b16 %v449, %v448
    %v521 = vpack.c.b16 %v451, %v450
    %v522 = vpack.c.b16 %v453, %v452
    %v523 = vpack.c.b16 %v455, %v454
    %v524 = vpack.c.b16 %v457, %v456
    %v525 = vpack.c.b16 %v459, %v458
    %v526 = vpack.c.b16 %v461, %v460
    %v527 = vpack.c.b16 %v463, %v462
    %592 = vmatprep.subr.bf16.mxu0 0
    %593 = vmatpush1.bf16.msra.mxu0 %v464
    %594 = vmatprep.subr.bf16.mxu0 0
    %595 = vmatpush1.bf16.msra.mxu0 %v465
    %596 = vmatprep.subr.bf16.mxu0 0
    %597 = vmatpush1.bf16.msra.mxu0 %v466
    %598 = vmatprep.subr.bf16.mxu0 0
    %599 = vmatpush1.bf16.msra.mxu0 %v467
    %600 = vmatprep.subr.bf16.mxu0 0
    %601 = vmatpush1.bf16.msra.mxu0 %v468
    %602 = vmatprep.subr.bf16.mxu0 0
    %603 = vmatpush1.bf16.msra.mxu0 %v469
    %604 = vmatprep.subr.bf16.mxu0 0
    %605 = vmatpush1.bf16.msra.mxu0 %v470
    %606 = vmatprep.subr.bf16.mxu0 0
    %607 = vmatpush1.bf16.msra.mxu0 %v471
    %608 = vmatprep.subr.bf16.mxu0 0
    %609 = vmatpush1.bf16.msra.mxu0 %v472
    %610 = vmatprep.subr.bf16.mxu0 0
    %611 = vmatpush1.bf16.msra.mxu0 %v473
    %612 = vmatprep.subr.bf16.mxu0 0
    %613 = vmatpush1.bf16.msra.mxu0 %v474
    %614 = vmatprep.subr.bf16.mxu0 0
    %615 = vmatpush1.bf16.msra.mxu0 %v475
    %616 = vmatprep.subr.bf16.mxu0 0
    %617 = vmatpush1.bf16.msra.mxu0 %v476
    %618 = vmatprep.subr.bf16.mxu0 0
    %619 = vmatpush1.bf16.msra.mxu0 %v477
    %620 = vmatprep.subr.bf16.mxu0 0
    %621 = vmatpush1.bf16.msra.mxu0 %v478
    %622 = vmatprep.subr.bf16.mxu0 0
    %623 = vmatpush1.bf16.msra.mxu0 %v479
    %624 = vmatprep.mubr.bf16.mxu0 %v193
    %625 = vmatmul.mubr.bf16.gmra.mrb[0].mxu0 %v192
    %v626 = vpop.f32.mrb[0].mxu0
    %v627 = vadd.f32 %v178, %v626
    %v628 = vpop.f32.mrb[0].mxu0
    %v629 = vpop.f32.mrb[0].mxu0
    %v630 = vpop.f32.mrb[0].mxu0
    %631 = vdwg.mxu0
    %632 = vmatprep.subr.bf16.mxu0 0
    %633 = vmatpush1.bf16.msra.mxu0 %v480
    %634 = vmatprep.subr.bf16.mxu0 0
    %635 = vmatpush1.bf16.msra.mxu0 %v481
    %636 = vmatprep.subr.bf16.mxu0 0
    %637 = vmatpush1.bf16.msra.mxu0 %v482
    %638 = vmatprep.subr.bf16.mxu0 0
    %639 = vmatpush1.bf16.msra.mxu0 %v483
    %640 = vmatprep.subr.bf16.mxu0 0
    %641 = vmatpush1.bf16.msra.mxu0 %v484
    %642 = vmatprep.subr.bf16.mxu0 0
    %643 = vmatpush1.bf16.msra.mxu0 %v485
    %644 = vmatprep.subr.bf16.mxu0 0
    %645 = vmatpush1.bf16.msra.mxu0 %v486
    %646 = vmatprep.subr.bf16.mxu0 0
    %647 = vmatpush1.bf16.msra.mxu0 %v487
    %648 = vmatprep.subr.bf16.mxu0 0
    %649 = vmatpush1.bf16.msra.mxu0 %v488
    %650 = vmatprep.subr.bf16.mxu0 0
    %651 = vmatpush1.bf16.msra.mxu0 %v489
    %652 = vmatprep.subr.bf16.mxu0 0
    %653 = vmatpush1.bf16.msra.mxu0 %v490
    %654 = vmatprep.subr.bf16.mxu0 0
    %655 = vmatpush1.bf16.msra.mxu0 %v491
    %656 = vmatprep.subr.bf16.mxu0 0
    %657 = vmatpush1.bf16.msra.mxu0 %v492
    %658 = vmatprep.subr.bf16.mxu0 0
    %659 = vmatpush1.bf16.msra.mxu0 %v493
    %660 = vmatprep.subr.bf16.mxu0 0
    %661 = vmatpush1.bf16.msra.mxu0 %v494
    %662 = vmatprep.subr.bf16.mxu0 0
    %663 = vmatpush1.bf16.msra.mxu0 %v495
    %664 = vmatprep.mubr.bf16.mxu0 %v195
    %665 = vmatmul.mubr.bf16.gmra.mrb[0].mxu0 %v194
    %v666 = vpop.f32.mrb[0].mxu0
    %v667 = vadd.f32 %v627, %v666
    %v668 = vpop.f32.mrb[0].mxu0
    %v669 = vpop.f32.mrb[0].mxu0
    %v670 = vpop.f32.mrb[0].mxu0
    %671 = vdwg.mxu0
    %672 = vmatprep.subr.bf16.mxu0 0
    %673 = vmatpush1.bf16.msra.mxu0 %v496
    %674 = vmatprep.subr.bf16.mxu0 0
    %675 = vmatpush1.bf16.msra.mxu0 %v497
    %676 = vmatprep.subr.bf16.mxu0 0
    %677 = vmatpush1.bf16.msra.mxu0 %v498
    %678 = vmatprep.subr.bf16.mxu0 0
    %679 = vmatpush1.bf16.msra.mxu0 %v499
    %680 = vmatprep.subr.bf16.mxu0 0
    %681 = vmatpush1.bf16.msra.mxu0 %v500
    %682 = vmatprep.subr.bf16.mxu0 0
    %683 = vmatpush1.bf16.msra.mxu0 %v501
    %684 = vmatprep.subr.bf16.mxu0 0
    %685 = vmatpush1.bf16.msra.mxu0 %v502
    %686 = vmatprep.subr.bf16.mxu0 0
    %687 = vmatpush1.bf16.msra.mxu0 %v503
    %688 = vmatprep.subr.bf16.mxu0 0
    %689 = vmatpush1.bf16.msra.mxu0 %v504
    %690 = vmatprep.subr.bf16.mxu0 0
    %691 = vmatpush1.bf16.msra.mxu0 %v505
    %692 = vmatprep.subr.bf16.mxu0 0
    %693 = vmatpush1.bf16.msra.mxu0 %v506
    %694 = vmatprep.subr.bf16.mxu0 0
    %695 = vmatpush1.bf16.msra.mxu0 %v507
    %696 = vmatprep.subr.bf16.mxu0 0
    %697 = vmatpush1.bf16.msra.mxu0 %v508
    %698 = vmatprep.subr.bf16.mxu0 0
    %699 = vmatpush1.bf16.msra.mxu0 %v509
    %700 = vmatprep.subr.bf16.mxu0 0
    %701 = vmatpush1.bf16.msra.mxu0 %v510
    %702 = vmatprep.subr.bf16.mxu0 0
    %703 = vmatpush1.bf16.msra.mxu0 %v511
    %704 = vmatprep.mubr.bf16.mxu0 %v197
    %705 = vmatmul.mubr.bf16.gmra.mrb[0].mxu0 %v196
    %v706 = vpop.f32.mrb[0].mxu0
    %v707 = vadd.f32 %v667, %v706
    %v708 = vpop.f32.mrb[0].mxu0
    %v709 = vpop.f32.mrb[0].mxu0
    %v710 = vpop.f32.mrb[0].mxu0
    %711 = vdwg.mxu0
    %712 = vmatprep.subr.bf16.mxu0 0
    %713 = vmatpush1.bf16.msra.mxu0 %v512
    %714 = vmatprep.subr.bf16.mxu0 0
    %715 = vmatpush1.bf16.msra.mxu0 %v513
    %716 = vmatprep.subr.bf16.mxu0 0
    %717 = vmatpush1.bf16.msra.mxu0 %v514
    %718 = vmatprep.subr.bf16.mxu0 0
    %719 = vmatpush1.bf16.msra.mxu0 %v515
    %720 = vmatprep.subr.bf16.mxu0 0
    %721 = vmatpush1.bf16.msra.mxu0 %v516
    %722 = vmatprep.subr.bf16.mxu0 0
    %723 = vmatpush1.bf16.msra.mxu0 %v517
    %724 = vmatprep.subr.bf16.mxu0 0
    %725 = vmatpush1.bf16.msra.mxu0 %v518
    %726 = vmatprep.subr.bf16.mxu0 0
    %727 = vmatpush1.bf16.msra.mxu0 %v519
    %728 = vmatprep.subr.bf16.mxu0 0
    %729 = vmatpush1.bf16.msra.mxu0 %v520
    %730 = vmatprep.subr.bf16.mxu0 0
    %731 = vmatpush1.bf16.msra.mxu0 %v521
    %732 = vmatprep.subr.bf16.mxu0 0
    %733 = vmatpush1.bf16.msra.mxu0 %v522
    %734 = vmatprep.subr.bf16.mxu0 0
    %735 = vmatpush1.bf16.msra.mxu0 %v523
    %736 = vmatprep.subr.bf16.mxu0 0
    %737 = vmatpush1.bf16.msra.mxu0 %v524
    %738 = vmatprep.subr.bf16.mxu0 0
    %739 = vmatpush1.bf16.msra.mxu0 %v525
    %740 = vmatprep.subr.bf16.mxu0 0
    %741 = vmatpush1.bf16.msra.mxu0 %v526
    %742 = vmatprep.subr.bf16.mxu0 0
    %743 = vmatpush1.bf16.msra.mxu0 %v527
    %744 = vmatprep.mubr.bf16.mxu0 %v199
    %745 = vmatmul.mubr.bf16.gmra.mrb[0].mxu0 %v198
    %v746 = vpop.f32.mrb[0].mxu0
    %v747 = vadd.f32 %v707, %v746
    %v748 = vpop.f32.mrb[0].mxu0
    %v749 = vpop.f32.mrb[0].mxu0
    %v750 = vpop.f32.mrb[0].mxu0
    %751 = vdwg.mxu0
    %752 = vmax.xlane.f32.xlu0 %v747
    %v753 = vpop.xlane.xlu0 %752
    %v754 = vsub.f32 %v747, %v753
    %v755 = vmul.f32 %v754, 1.442695
    %v756 = vpow.pop %v755
    %757 = vadd.xlane.f32.xlu0 %v756
    %v758 = vpop.xlane.xlu0 %757
    %v759 = vlog2.pop %v758
    %v760 = vmul.f32 %v759, 0.6931472
    %v761 = vadd.f32 %v753, %v760
    %v762 = vsub.f32 0.0, %v761
    %vm763 = vcmask 7168
    %764 = vst.msk [vmem:[%s3] sm:$0xff] %vm763, %v762
    // Predicated region
    $region22: #{tpu_custom_call.1} parent=1 // pred_check
      _
    $region23: #{tpu_custom_call.1} parent=1 // pred_check_branch
      %766 = sbr.rel (0) target = $region25
    $region24: #{tpu_custom_call.1} parent=1 // pred_region
      _
    $region25: #{tpu_custom_call.1} parent=1 // pred_fallthru
      _
    // Predicated region
    $region26: #{tpu_custom_call.1} parent=1 // pred_check
      _
    $region27: #{tpu_custom_call.1} parent=1 // pred_check_branch
      %768 = sbr.rel (0) target = $region29
    $region28: #{tpu_custom_call.1} parent=1 // pred_region
      _
    $region29: #{tpu_custom_call.1} parent=1 // pred_fallthru
      _
    %769 = vsyncpa [#allocation3], 1
    %770 = vsyncpa [#allocation5], 1

// kernel: tpu_custom_call.1
$region0: #{tpu_custom_call.1}
  #allocation0 [shape = 'u32[]', space=smem, size = 0x4, offset = 0x4, fixed_abs, tag = 'smem constant byte address 0x4 - core index']
  #allocation1 [shape = 'u32[144,128]{1,0:T(1,128)}', space=vmem, size = 0x12000, scoped, tag = 'internal scratch']
  %s0 = inlined_call_operand.hbm [shape: bf16[8,1024], index: 0, kind: input, shape index: {}]
  %s1 = inlined_call_operand.hbm [shape: bf16[1024,128], index: 1, kind: input, shape index: {}]
  %s2 = inlined_call_operand.vmem [shape: f32[1,128], index: 2, kind: input, shape index: {}]
  %s3 = inlined_call_operand.vmem [shape: f32[8,1], index: 3, kind: output, shape index: {}]
  %s4 = sld [smem:[#allocation0]]
  $region30: #{tpu_custom_call.1} parent=0
    _
  %s6 = ssub.s32 1, %s4
  %s7 = scalar_select 0, %s6, %s4
  $region1: #{tpu_custom_call.1} parent=0
    #allocation2 [shape = 'u8[16384]{0}', space=vmem, size = 0x4000, scoped, tag = 'input window, operand 0, single buffered']
    #allocation3 [shape = 's32[1]{0}', space=sflag, size = 0x4, scoped, tag = 'scoped memory for tpu_custom_call.1']
    #allocation4 [shape = 'u8[262144]{0}', space=vmem, size = 0x40000, scoped, tag = 'input window, operand 1, single buffered']
    #allocation5 [shape = 's32[1]{0}', space=sflag, size = 0x4, scoped, tag = 'scoped memory for tpu_custom_call.1']
    %8 = vsyncpa [#allocation3], 0
    %9 = vsyncpa [#allocation5], 0
    // Predicated region
    $region2: #{tpu_custom_call.1} parent=1 // pred_check
      _
    $region3: #{tpu_custom_call.1} parent=1 // pred_check_branch
      %11 = sbr.rel (0) target = $region5
    $region4: #{tpu_custom_call.1} parent=1 // pred_region
      %s13 = ssub.s32 512, 512
      %14 = vsyncadd [#allocation3], %s13
      %s16 = sshll.u32 [#allocation2], 4
      %s17 = int_to_ptr.vmem [resolvable:$true] %s16
      %19 = dma.hbm_to_vmem [thread:$0]  %s0, 512, %s17, [#allocation3]
    $region5: #{tpu_custom_call.1} parent=1 // pred_fallthru
      _
    // Predicated region
    $region6: #{tpu_custom_call.1} parent=1 // pred_check
      _
    $region7: #{tpu_custom_call.1} parent=1 // pred_check_branch
      %21 = sbr.rel (0) target = $region9
    $region8: #{tpu_custom_call.1} parent=1 // pred_region
      %s23 = ssub.s32 8192, 8192
      %24 = vsyncadd [#allocation5], %s23
      %s25 = sshll.u32 [#allocation4], 4
      %s26 = int_to_ptr.vmem [resolvable:$true] %s25
      %31 = dma.hbm_to_vmem [thread:$0]  %s1, 8192, %s26, [#allocation5], 64, 64, 4
    $region9: #{tpu_custom_call.1} parent=1 // pred_fallthru
      _
    // Predicated region
    $region10: #{tpu_custom_call.1} parent=1 // pred_check
      _
    $region11: #{tpu_custom_call.1} parent=1 // pred_check_branch
      %33 = sbr.rel (0) target = $region13
    $region12: #{tpu_custom_call.1} parent=1 // pred_region
      _
    $region13: #{tpu_custom_call.1} parent=1 // pred_fallthru
      _
    // Predicated region
    $region14: #{tpu_custom_call.1} parent=1 // pred_check
      _
    $region15: #{tpu_custom_call.1} parent=1 // pred_check_branch
      %35 = sbr.rel (0) target = $region17
    $region16: #{tpu_custom_call.1} parent=1 // pred_region
      %36 = dma.done [#allocation3], 512
    $region17: #{tpu_custom_call.1} parent=1 // pred_fallthru
      _
    // Predicated region
    $region18: #{tpu_custom_call.1} parent=1 // pred_check
      _
    $region19: #{tpu_custom_call.1} parent=1 // pred_check_branch
      %38 = sbr.rel (0) target = $region21
    $region20: #{tpu_custom_call.1} parent=1 // pred_region
      %39 = dma.done [#allocation5], 8192
    $region21: #{tpu_custom_call.1} parent=1 // pred_fallthru
      _
    %v41 = vld [vmem:[#allocation2] sm:$0xff]
    %v42 = vld [vmem:[#allocation2 + $0x8] sm:$0xff]
    %v43 = vld [vmem:[#allocation2 + $0x10] sm:$0xff]
    %v44 = vld [vmem:[#allocation2 + $0x18] sm:$0xff]
    %v45 = vld [vmem:[#allocation4] sm:$0xf]
    %v46 = vld [vmem:[#allocation4 + $0x4] sm:$0xf]
    %v47 = vld [vmem:[#allocation4 + $0x8] sm:$0xf]
    %v48 = vld [vmem:[#allocation4 + $0xc] sm:$0xf]
    %v49 = vld [vmem:[#allocation4 + $0x10] sm:$0xf]
    %v50 = vld [vmem:[#allocation4 + $0x14] sm:$0xf]
    %v51 = vld [vmem:[#allocation4 + $0x18] sm:$0xf]
    %v52 = vld [vmem:[#allocation4 + $0x1c] sm:$0xf]
    %v53 = vld [vmem:[#allocation4 + $0x20] sm:$0xf]
    %v54 = vld [vmem:[#allocation4 + $0x24] sm:$0xf]
    %v55 = vld [vmem:[#allocation4 + $0x28] sm:$0xf]
    %v56 = vld [vmem:[#allocation4 + $0x2c] sm:$0xf]
    %v57 = vld [vmem:[#allocation4 + $0x30] sm:$0xf]
    %v58 = vld [vmem:[#allocation4 + $0x34] sm:$0xf]
    %v59 = vld [vmem:[#allocation4 + $0x38] sm:$0xf]
    %v60 = vld [vmem:[#allocation4 + $0x3c] sm:$0xf]
    %v61 = vld [vmem:[#allocation4 + $0x40] sm:$0xf]
    %v62 = vld [vmem:[#allocation4 + $0x44] sm:$0xf]
    %v63 = vld [vmem:[#allocation4 + $0x48] sm:$0xf]
    %v64 = vld [vmem:[#allocation4 + $0x4c] sm:$0xf]
    %v65 = vld [vmem:[#allocation4 + $0x50] sm:$0xf]
    %v66 = vld [vmem:[#allocation4 + $0x54] sm:$0xf]
    %v67 = vld [vmem:[#allocation4 + $0x58] sm:$0xf]
    %v68 = vld [vmem:[#allocation4 + $0x5c] sm:$0xf]
    %v69 = vld [vmem:[#allocation4 + $0x60] sm:$0xf]
    %v70 = vld [vmem:[#allocation4 + $0x64] sm:$0xf]
    %v71 = vld [vmem:[#allocation4 + $0x68] sm:$0xf]
    %v72 = vld [vmem:[#allocation4 + $0x6c] sm:$0xf]
    %v73 = vld [vmem:[#allocation4 + $0x70] sm:$0xf]
    %v74 = vld [vmem:[#allocation4 + $0x74] sm:$0xf]
    %v75 = vld [vmem:[#allocation4 + $0x78] sm:$0xf]
    %v76 = vld [vmem:[#allocation4 + $0x7c] sm:$0xf]
    %v77 = vld [vmem:[#allocation4 + $0x80] sm:$0xf]
    %v78 = vld [vmem:[#allocation4 + $0x84] sm:$0xf]
    %v79 = vld [vmem:[#allocation4 + $0x88] sm:$0xf]
    %v80 = vld [vmem:[#allocation4 + $0x8c] sm:$0xf]
    %v81 = vld [vmem:[#allocation4 + $0x90] sm:$0xf]
    %v82 = vld [vmem:[#allocation4 + $0x94] sm:$0xf]
    %v83 = vld [vmem:[#allocation4 + $0x98] sm:$0xf]
    %v84 = vld [vmem:[#allocation4 + $0x9c] sm:$0xf]
    %v85 = vld [vmem:[#allocation4 + $0xa0] sm:$0xf]
    %v86 = vld [vmem:[#allocation4 + $0xa4] sm:$0xf]
    %v87 = vld [vmem:[#allocation4 + $0xa8] sm:$0xf]
    %v88 = vld [vmem:[#allocation4 + $0xac] sm:$0xf]
    %v89 = vld [vmem:[#allocation4 + $0xb0] sm:$0xf]
    %v90 = vld [vmem:[#allocation4 + $0xb4] sm:$0xf]
    %v91 = vld [vmem:[#allocation4 + $0xb8] sm:$0xf]
    %v92 = vld [vmem:[#allocation4 + $0xbc] sm:$0xf]
    %v93 = vld [vmem:[#allocation4 + $0xc0] sm:$0xf]
    %v94 = vld [vmem:[#allocation4 + $0xc4] sm:$0xf]
    %v95 = vld [vmem:[#allocation4 + $0xc8] sm:$0xf]
    %v96 = vld [vmem:[#allocation4 + $0xcc] sm:$0xf]
    %v97 = vld [vmem:[#allocation4 + $0xd0] sm:$0xf]
    %v98 = vld [vmem:[#allocation4 + $0xd4] sm:$0xf]
    %v99 = vld [vmem:[#allocation4 + $0xd8] sm:$0xf]
    %v100 = vld [vmem:[#allocation4 + $0xdc] sm:$0xf]
    %v101 = vld [vmem:[#allocation4 + $0xe0] sm:$0xf]
    %v102 = vld [vmem:[#allocation4 + $0xe4] sm:$0xf]
    %v103 = vld [vmem:[#allocation4 + $0xe8] sm:$0xf]
    %v104 = vld [vmem:[#allocation4 + $0xec] sm:$0xf]
    %v105 = vld [vmem:[#allocation4 + $0xf0] sm:$0xf]
    %v106 = vld [vmem:[#allocation4 + $0xf4] sm:$0xf]
    %v107 = vld [vmem:[#allocation4 + $0xf8] sm:$0xf]
    %v108 = vld [vmem:[#allocation4 + $0xfc] sm:$0xf]
    %v109 = vld [vmem:[#allocation4 + $0x100] sm:$0xf]
    %v110 = vld [vmem:[#allocation4 + $0x104] sm:$0xf]
    %v111 = vld [vmem:[#allocation4 + $0x108] sm:$0xf]
    %v112 = vld [vmem:[#allocation4 + $0x10c] sm:$0xf]
    %v113 = vld [vmem:[#allocation4 + $0x110] sm:$0xf]
    %v114 = vld [vmem:[#allocation4 + $0x114] sm:$0xf]
    %v115 = vld [vmem:[#allocation4 + $0x118] sm:$0xf]
    %v116 = vld [vmem:[#allocation4 + $0x11c] sm:$0xf]
    %v117 = vld [vmem:[#allocation4 + $0x120] sm:$0xf]
    %v118 = vld [vmem:[#allocation4 + $0x124] sm:$0xf]
    %v119 = vld [vmem:[#allocation4 + $0x128] sm:$0xf]
    %v120 = vld [vmem:[#allocation4 + $0x12c] sm:$0xf]
    %v121 = vld [vmem:[#allocation4 + $0x130] sm:$0xf]
    %v122 = vld [vmem:[#allocation4 + $0x134] sm:$0xf]
    %v123 = vld [vmem:[#allocation4 + $0x138] sm:$0xf]
    %v124 = vld [vmem:[#allocation4 + $0x13c] sm:$0xf]
    %v125 = vld [vmem:[#allocation4 + $0x140] sm:$0xf]
    %v126 = vld [vmem:[#allocation4 + $0x144] sm:$0xf]
    %v127 = vld [vmem:[#allocation4 + $0x148] sm:$0xf]
    %v128 = vld [vmem:[#allocation4 + $0x14c] sm:$0xf]
    %v129 = vld [vmem:[#allocation4 + $0x150] sm:$0xf]
    %v130 = vld [vmem:[#allocation4 + $0x154] sm:$0xf]
    %v131 = vld [vmem:[#allocation4 + $0x158] sm:$0xf]
    %v132 = vld [vmem:[#allocation4 + $0x15c] sm:$0xf]
    %v133 = vld [vmem:[#allocation4 + $0x160] sm:$0xf]
    %v134 = vld [vmem:[#allocation4 + $0x164] sm:$0xf]
    %v135 = vld [vmem:[#allocation4 + $0x168] sm:$0xf]
    %v136 = vld [vmem:[#allocation4 + $0x16c] sm:$0xf]
    %v137 = vld [vmem:[#allocation4 + $0x170] sm:$0xf]
    %v138 = vld [vmem:[#allocation4 + $0x174] sm:$0xf]
    %v139 = vld [vmem:[#allocation4 + $0x178] sm:$0xf]
    %v140 = vld [vmem:[#allocation4 + $0x17c] sm:$0xf]
    %v141 = vld [vmem:[#allocation4 + $0x180] sm:$0xf]
    %v142 = vld [vmem:[#allocation4 + $0x184] sm:$0xf]
    %v143 = vld [vmem:[#allocation4 + $0x188] sm:$0xf]
    %v144 = vld [vmem:[#allocation4 + $0x18c] sm:$0xf]
    %v145 = vld [vmem:[#allocation4 + $0x190] sm:$0xf]
    %v146 = vld [vmem:[#allocation4 + $0x194] sm:$0xf]
    %v147 = vld [vmem:[#allocation4 + $0x198] sm:$0xf]
    %v148 = vld [vmem:[#allocation4 + $0x19c] sm:$0xf]
    %v149 = vld [vmem:[#allocation4 + $0x1a0] sm:$0xf]
    %v150 = vld [vmem:[#allocation4 + $0x1a4] sm:$0xf]
    %v151 = vld [vmem:[#allocation4 + $0x1a8] sm:$0xf]
    %v152 = vld [vmem:[#allocation4 + $0x1ac] sm:$0xf]
    %v153 = vld [vmem:[#allocation4 + $0x1b0] sm:$0xf]
    %v154 = vld [vmem:[#allocation4 + $0x1b4] sm:$0xf]
    %v155 = vld [vmem:[#allocation4 + $0x1b8] sm:$0xf]
    %v156 = vld [vmem:[#allocation4 + $0x1bc] sm:$0xf]
    %v157 = vld [vmem:[#allocation4 + $0x1c0] sm:$0xf]
    %v158 = vld [vmem:[#allocation4 + $0x1c4] sm:$0xf]
    %v159 = vld [vmem:[#allocation4 + $0x1c8] sm:$0xf]
    %v160 = vld [vmem:[#allocation4 + $0x1cc] sm:$0xf]
    %v161 = vld [vmem:[#allocation4 + $0x1d0] sm:$0xf]
    %v162 = vld [vmem:[#allocation4 + $0x1d4] sm:$0xf]
    %v163 = vld [vmem:[#allocation4 + $0x1d8] sm:$0xf]
    %v164 = vld [vmem:[#allocation4 + $0x1dc] sm:$0xf]
    %v165 = vld [vmem:[#allocation4 + $0x1e0] sm:$0xf]
    %v166 = vld [vmem:[#allocation4 + $0x1e4] sm:$0xf]
    %v167 = vld [vmem:[#allocation4 + $0x1e8] sm:$0xf]
    %v168 = vld [vmem:[#allocation4 + $0x1ec] sm:$0xf]
    %v169 = vld [vmem:[#allocation4 + $0x1f0] sm:$0xf]
    %v170 = vld [vmem:[#allocation4 + $0x1f4] sm:$0xf]
    %v171 = vld [vmem:[#allocation4 + $0x1f8] sm:$0xf]
    %v172 = vld [vmem:[#allocation4 + $0x1fc] sm:$0xf]
    %v173 = vld [vmem:[%s2] sm:$0x1]
    %v175 = vlaneseq
    %v176 = vshrl.u32 %v175, 7
    %v177 = vsub.s32 0, %v176
    %v178 = vrot.slane %v173, %v177
    %v184 = vunpack.c.l.b16 %v41
    %v185 = vunpack.c.h.b16 %v41
    %v186 = vunpack.c.l.b16 %v42
    %v187 = vunpack.c.h.b16 %v42
    %v188 = vunpack.c.l.b16 %v43
    %v189 = vunpack.c.h.b16 %v43
    %v190 = vunpack.c.l.b16 %v44
    %v191 = vunpack.c.h.b16 %v44
    %v192 = vpack.c.b16 %v184, %v184
    %v193 = vpack.c.b16 %v185, %v185
    %v194 = vpack.c.b16 %v186, %v186
    %v195 = vpack.c.b16 %v187, %v187
    %v196 = vpack.c.b16 %v188, %v188
    %v197 = vpack.c.b16 %v189, %v189
    %v198 = vpack.c.b16 %v190, %v190
    %v199 = vpack.c.b16 %v191, %v191
    %v336 = vunpack.c.l.b16 %v45
    %v337 = vunpack.c.l.b16 %v46
    %v338 = vunpack.c.l.b16 %v47
    %v339 = vunpack.c.l.b16 %v48
    %v340 = vunpack.c.l.b16 %v49
    %v341 = vunpack.c.l.b16 %v50
    %v342 = vunpack.c.l.b16 %v51
    %v343 = vunpack.c.l.b16 %v52
    %v344 = vunpack.c.l.b16 %v53
    %v345 = vunpack.c.l.b16 %v54
    %v346 = vunpack.c.l.b16 %v55
    %v347 = vunpack.c.l.b16 %v56
    %v348 = vunpack.c.l.b16 %v57
    %v349 = vunpack.c.l.b16 %v58
    %v350 = vunpack.c.l.b16 %v59
    %v351 = vunpack.c.l.b16 %v60
    %v352 = vunpack.c.l.b16 %v61
    %v353 = vunpack.c.l.b16 %v62
    %v354 = vunpack.c.l.b16 %v63
    %v355 = vunpack.c.l.b16 %v64
    %v356 = vunpack.c.l.b16 %v65
    %v357 = vunpack.c.l.b16 %v66
    %v358 = vunpack.c.l.b16 %v67
    %v359 = vunpack.c.l.b16 %v68
    %v360 = vunpack.c.l.b16 %v69
    %v361 = vunpack.c.l.b16 %v70
    %v362 = vunpack.c.l.b16 %v71
    %v363 = vunpack.c.l.b16 %v72
    %v364 = vunpack.c.l.b16 %v73
    %v365 = vunpack.c.l.b16 %v74
    %v366 = vunpack.c.l.b16 %v75
    %v367 = vunpack.c.l.b16 %v76
    %v368 = vunpack.c.l.b16 %v77
    %v369 = vunpack.c.l.b16 %v78
    %v370 = vunpack.c.l.b16 %v79
    %v371 = vunpack.c.l.b16 %v80
    %v372 = vunpack.c.l.b16 %v81
    %v373 = vunpack.c.l.b16 %v82
    %v374 = vunpack.c.l.b16 %v83
    %v375 = vunpack.c.l.b16 %v84
    %v376 = vunpack.c.l.b16 %v85
    %v377 = vunpack.c.l.b16 %v86
    %v378 = vunpack.c.l.b16 %v87
    %v379 = vunpack.c.l.b16 %v88
    %v380 = vunpack.c.l.b16 %v89
    %v381 = vunpack.c.l.b16 %v90
    %v382 = vunpack.c.l.b16 %v91
    %v383 = vunpack.c.l.b16 %v92
    %v384 = vunpack.c.l.b16 %v93
    %v385 = vunpack.c.l.b16 %v94
    %v386 = vunpack.c.l.b16 %v95
    %v387 = vunpack.c.l.b16 %v96
    %v388 = vunpack.c.l.b16 %v97
    %v389 = vunpack.c.l.b16 %v98
    %v390 = vunpack.c.l.b16 %v99
    %v391 = vunpack.c.l.b16 %v100
    %v392 = vunpack.c.l.b16 %v101
    %v393 = vunpack.c.l.b16 %v102
    %v394 = vunpack.c.l.b16 %v103
    %v395 = vunpack.c.l.b16 %v104
    %v396 = vunpack.c.l.b16 %v105
    %v397 = vunpack.c.l.b16 %v106
    %v398 = vunpack.c.l.b16 %v107
    %v399 = vunpack.c.l.b16 %v108
    %v400 = vunpack.c.l.b16 %v109
    %v401 = vunpack.c.l.b16 %v110
    %v402 = vunpack.c.l.b16 %v111
    %v403 = vunpack.c.l.b16 %v112
    %v404 = vunpack.c.l.b16 %v113
    %v405 = vunpack.c.l.b16 %v114
    %v406 = vunpack.c.l.b16 %v115
    %v407 = vunpack.c.l.b16 %v116
    %v408 = vunpack.c.l.b16 %v117
    %v409 = vunpack.c.l.b16 %v118
    %v410 = vunpack.c.l.b16 %v119
    %v411 = vunpack.c.l.b16 %v120
    %v412 = vunpack.c.l.b16 %v121
    %v413 = vunpack.c.l.b16 %v122
    %v414 = vunpack.c.l.b16 %v123
    %v415 = vunpack.c.l.b16 %v124
    %v416 = vunpack.c.l.b16 %v125
    %v417 = vunpack.c.l.b16 %v126
    %v418 = vunpack.c.l.b16 %v127
    %v419 = vunpack.c.l.b16 %v128
    %v420 = vunpack.c.l.b16 %v129
    %v421 = vunpack.c.l.b16 %v130
    %v422 = vunpack.c.l.b16 %v131
    %v423 = vunpack.c.l.b16 %v132
    %v424 = vunpack.c.l.b16 %v133
    %v425 = vunpack.c.l.b16 %v134
    %v426 = vunpack.c.l.b16 %v135
    %v427 = vunpack.c.l.b16 %v136
    %v428 = vunpack.c.l.b16 %v137
    %v429 = vunpack.c.l.b16 %v138
    %v430 = vunpack.c.l.b16 %v139
    %v431 = vunpack.c.l.b16 %v140
    %v432 = vunpack.c.l.b16 %v141
    %v433 = vunpack.c.l.b16 %v142
    %v434 = vunpack.c.l.b16 %v143
    %v435 = vunpack.c.l.b16 %v144
    %v436 = vunpack.c.l.b16 %v145
    %v437 = vunpack.c.l.b16 %v146
    %v438 = vunpack.c.l.b16 %v147
    %v439 = vunpack.c.l.b16 %v148
    %v440 = vunpack.c.l.b16 %v149
    %v441 = vunpack.c.l.b16 %v150
    %v442 = vunpack.c.l.b16 %v151
    %v443 = vunpack.c.l.b16 %v152
    %v444 = vunpack.c.l.b16 %v153
    %v445 = vunpack.c.l.b16 %v154
    %v446 = vunpack.c.l.b16 %v155
    %v447 = vunpack.c.l.b16 %v156
    %v448 = vunpack.c.l.b16 %v157
    %v449 = vunpack.c.l.b16 %v158
    %v450 = vunpack.c.l.b16 %v159
    %v451 = vunpack.c.l.b16 %v160
    %v452 = vunpack.c.l.b16 %v161
    %v453 = vunpack.c.l.b16 %v162
    %v454 = vunpack.c.l.b16 %v163
    %v455 = vunpack.c.l.b16 %v164
    %v456 = vunpack.c.l.b16 %v165
    %v457 = vunpack.c.l.b16 %v166
    %v458 = vunpack.c.l.b16 %v167
    %v459 = vunpack.c.l.b16 %v168
    %v460 = vunpack.c.l.b16 %v169
    %v461 = vunpack.c.l.b16 %v170
    %v462 = vunpack.c.l.b16 %v171
    %v463 = vunpack.c.l.b16 %v172
    %v464 = vpack.c.b16 %v337, %v336
    %v465 = vpack.c.b16 %v339, %v338
    %v466 = vpack.c.b16 %v341, %v340
    %v467 = vpack.c.b16 %v343, %v342
    %v468 = vpack.c.b16 %v345, %v344
    %v469 = vpack.c.b16 %v347, %v346
    %v470 = vpack.c.b16 %v349, %v348
    %v471 = vpack.c.b16 %v351, %v350
    %v472 = vpack.c.b16 %v353, %v352
    %v473 = vpack.c.b16 %v355, %v354
    %v474 = vpack.c.b16 %v357, %v356
    %v475 = vpack.c.b16 %v359, %v358
    %v476 = vpack.c.b16 %v361, %v360
    %v477 = vpack.c.b16 %v363, %v362
    %v478 = vpack.c.b16 %v365, %v364
    %v479 = vpack.c.b16 %v367, %v366
    %v480 = vpack.c.b16 %v369, %v368
    %v481 = vpack.c.b16 %v371, %v370
    %v482 = vpack.c.b16 %v373, %v372
    %v483 = vpack.c.b16 %v375, %v374
    %v484 = vpack.c.b16 %v377, %v376
    %v485 = vpack.c.b16 %v379, %v378
    %v486 = vpack.c.b16 %v381, %v380
    %v487 = vpack.c.b16 %v383, %v382
    %v488 = vpack.c.b16 %v385, %v384
    %v489 = vpack.c.b16 %v387, %v386
    %v490 = vpack.c.b16 %v389, %v388
    %v491 = vpack.c.b16 %v391, %v390
    %v492 = vpack.c.b16 %v393, %v392
    %v493 = vpack.c.b16 %v395, %v394
    %v494 = vpack.c.b16 %v397, %v396
    %v495 = vpack.c.b16 %v399, %v398
    %v496 = vpack.c.b16 %v401, %v400
    %v497 = vpack.c.b16 %v403, %v402
    %v498 = vpack.c.b16 %v405, %v404
    %v499 = vpack.c.b16 %v407, %v406
    %v500 = vpack.c.b16 %v409, %v408
    %v501 = vpack.c.b16 %v411, %v410
    %v502 = vpack.c.b16 %v413, %v412
    %v503 = vpack.c.b16 %v415, %v414
    %v504 = vpack.c.b16 %v417, %v416
    %v505 = vpack.c.b16 %v419, %v418
    %v506 = vpack.c.b16 %v421, %v420
    %v507 = vpack.c.b16 %v423, %v422
    %v508 = vpack.c.b16 %v425, %v424
    %v509 = vpack.c.b16 %v427, %v426
    %v510 = vpack.c.b16 %v429, %v428
    %v511 = vpack.c.b16 %v431, %v430
    %v512 = vpack.c.b16 %v433, %v432
    %v513 = vpack.c.b16 %v435, %v434
    %v514 = vpack.c.b16 %v437, %v436
    %v515 = vpack.c.b16 %v439, %v438
    %v516 = vpack.c.b16 %v441, %v440
    %v517 = vpack.c.b16 %v443, %v442
    %v518 = vpack.c.b16 %v445, %v444
    %v519 = vpack.c.b16 %v447, %v446
    %v520 = vpack.c.b16 %v449, %v448
    %v521 = vpack.c.b16 %v451, %v450
    %v522 = vpack.c.b16 %v453, %v452
    %v523 = vpack.c.b16 %v455, %v454
    %v524 = vpack.c.b16 %v457, %v456
    %v525 = vpack.c.b16 %v459, %v458
    %v526 = vpack.c.b16 %v461, %v460
    %v527 = vpack.c.b16 %v463, %v462
    %592 = vmatprep.subr.bf16.mxu0 0
    %593 = vmatpush1.bf16.msra.mxu0 %v464
    %594 = vmatprep.subr.bf16.mxu0 0
    %595 = vmatpush1.bf16.msra.mxu0 %v465
    %596 = vmatprep.subr.bf16.mxu0 0
    %597 = vmatpush1.bf16.msra.mxu0 %v466
    %598 = vmatprep.subr.bf16.mxu0 0
    %599 = vmatpush1.bf16.msra.mxu0 %v467
    %600 = vmatprep.subr.bf16.mxu0 0
    %601 = vmatpush1.bf16.msra.mxu0 %v468
    %602 = vmatprep.subr.bf16.mxu0 0
    %603 = vmatpush1.bf16.msra.mxu0 %v469
    %604 = vmatprep.subr.bf16.mxu0 0
    %605 = vmatpush1.bf16.msra.mxu0 %v470
    %606 = vmatprep.subr.bf16.mxu0 0
    %607 = vmatpush1.bf16.msra.mxu0 %v471
    %608 = vmatprep.subr.bf16.mxu0 0
    %609 = vmatpush1.bf16.msra.mxu0 %v472
    %610 = vmatprep.subr.bf16.mxu0 0
    %611 = vmatpush1.bf16.msra.mxu0 %v473
    %612 = vmatprep.subr.bf16.mxu0 0
    %613 = vmatpush1.bf16.msra.mxu0 %v474
    %614 = vmatprep.subr.bf16.mxu0 0
    %615 = vmatpush1.bf16.msra.mxu0 %v475
    %616 = vmatprep.subr.bf16.mxu0 0
    %617 = vmatpush1.bf16.msra.mxu0 %v476
    %618 = vmatprep.subr.bf16.mxu0 0
    %619 = vmatpush1.bf16.msra.mxu0 %v477
    %620 = vmatprep.subr.bf16.mxu0 0
    %621 = vmatpush1.bf16.msra.mxu0 %v478
    %622 = vmatprep.subr.bf16.mxu0 0
    %623 = vmatpush1.bf16.msra.mxu0 %v479
    %624 = vmatprep.mubr.bf16.mxu0 %v193
    %625 = vmatmul.mubr.bf16.gmra.mrb[0].mxu0 %v192
    %v626 = vpop.f32.mrb[0].mxu0
    %v627 = vadd.f32 %v178, %v626
    %v628 = vpop.f32.mrb[0].mxu0
    %v629 = vpop.f32.mrb[0].mxu0
    %v630 = vpop.f32.mrb[0].mxu0
    %631 = vdwg.mxu0
    %632 = vmatprep.subr.bf16.mxu0 0
    %633 = vmatpush1.bf16.msra.mxu0 %v480
    %634 = vmatprep.subr.bf16.mxu0 0
    %635 = vmatpush1.bf16.msra.mxu0 %v481
    %636 = vmatprep.subr.bf16.mxu0 0
    %637 = vmatpush1.bf16.msra.mxu0 %v482
    %638 = vmatprep.subr.bf16.mxu0 0
    %639 = vmatpush1.bf16.msra.mxu0 %v483
    %640 = vmatprep.subr.bf16.mxu0 0
    %641 = vmatpush1.bf16.msra.mxu0 %v484
    %642 = vmatprep.subr.bf16.mxu0 0
    %643 = vmatpush1.bf16.msra.mxu0 %v485
    %644 = vmatprep.subr.bf16.mxu0 0
    %645 = vmatpush1.bf16.msra.mxu0 %v486
    %646 = vmatprep.subr.bf16.mxu0 0
    %647 = vmatpush1.bf16.msra.mxu0 %v487
    %648 = vmatprep.subr.bf16.mxu0 0
    %649 = vmatpush1.bf16.msra.mxu0 %v488
    %650 = vmatprep.subr.bf16.mxu0 0
    %651 = vmatpush1.bf16.msra.mxu0 %v489
    %652 = vmatprep.subr.bf16.mxu0 0
    %653 = vmatpush1.bf16.msra.mxu0 %v490
    %654 = vmatprep.subr.bf16.mxu0 0
    %655 = vmatpush1.bf16.msra.mxu0 %v491
    %656 = vmatprep.subr.bf16.mxu0 0
    %657 = vmatpush1.bf16.msra.mxu0 %v492
    %658 = vmatprep.subr.bf16.mxu0 0
    %659 = vmatpush1.bf16.msra.mxu0 %v493
    %660 = vmatprep.subr.bf16.mxu0 0
    %661 = vmatpush1.bf16.msra.mxu0 %v494
    %662 = vmatprep.subr.bf16.mxu0 0
    %663 = vmatpush1.bf16.msra.mxu0 %v495
    %664 = vmatprep.mubr.bf16.mxu0 %v195
    %665 = vmatmul.mubr.bf16.gmra.mrb[0].mxu0 %v194
    %v666 = vpop.f32.mrb[0].mxu0
    %v667 = vadd.f32 %v627, %v666
    %v668 = vpop.f32.mrb[0].mxu0
    %v669 = vpop.f32.mrb[0].mxu0
    %v670 = vpop.f32.mrb[0].mxu0
    %671 = vdwg.mxu0
    %672 = vmatprep.subr.bf16.mxu0 0
    %673 = vmatpush1.bf16.msra.mxu0 %v496
    %674 = vmatprep.subr.bf16.mxu0 0
    %675 = vmatpush1.bf16.msra.mxu0 %v497
    %676 = vmatprep.subr.bf16.mxu0 0
    %677 = vmatpush1.bf16.msra.mxu0 %v498
    %678 = vmatprep.subr.bf16.mxu0 0
    %679 = vmatpush1.bf16.msra.mxu0 %v499
    %680 = vmatprep.subr.bf16.mxu0 0
    %681 = vmatpush1.bf16.msra.mxu0 %v500
    %682 = vmatprep.subr.bf16.mxu0 0
    %683 = vmatpush1.bf16.msra.mxu0 %v501
    %684 = vmatprep.subr.bf16.mxu0 0
    %685 = vmatpush1.bf16.msra.mxu0 %v502
    %686 = vmatprep.subr.bf16.mxu0 0
    %687 = vmatpush1.bf16.msra.mxu0 %v503
    %688 = vmatprep.subr.bf16.mxu0 0
    %689 = vmatpush1.bf16.msra.mxu0 %v504
    %690 = vmatprep.subr.bf16.mxu0 0
    %691 = vmatpush1.bf16.msra.mxu0 %v505
    %692 = vmatprep.subr.bf16.mxu0 0
    %693 = vmatpush1.bf16.msra.mxu0 %v506
    %694 = vmatprep.subr.bf16.mxu0 0
    %695 = vmatpush1.bf16.msra.mxu0 %v507
    %696 = vmatprep.subr.bf16.mxu0 0
    %697 = vmatpush1.bf16.msra.mxu0 %v508
    %698 = vmatprep.subr.bf16.mxu0 0
    %699 = vmatpush1.bf16.msra.mxu0 %v509
    %700 = vmatprep.subr.bf16.mxu0 0
    %701 = vmatpush1.bf16.msra.mxu0 %v510
    %702 = vmatprep.subr.bf16.mxu0 0
    %703 = vmatpush1.bf16.msra.mxu0 %v511
    %704 = vmatprep.mubr.bf16.mxu0 %v197
    %705 = vmatmul.mubr.bf16.gmra.mrb[0].mxu0 %v196
    %v706 = vpop.f32.mrb[0].mxu0
    %v707 = vadd.f32 %v667, %v706
    %v708 = vpop.f32.mrb[0].mxu0
    %v709 = vpop.f32.mrb[0].mxu0
    %v710 = vpop.f32.mrb[0].mxu0
    %711 = vdwg.mxu0
    %712 = vmatprep.subr.bf16.mxu0 0
    %713 = vmatpush1.bf16.msra.mxu0 %v512
    %714 = vmatprep.subr.bf16.mxu0 0
    %715 = vmatpush1.bf16.msra.mxu0 %v513
    %716 = vmatprep.subr.bf16.mxu0 0
    %717 = vmatpush1.bf16.msra.mxu0 %v514
    %718 = vmatprep.subr.bf16.mxu0 0
    %719 = vmatpush1.bf16.msra.mxu0 %v515
    %720 = vmatprep.subr.bf16.mxu0 0
    %721 = vmatpush1.bf16.msra.mxu0 %v516
    %722 = vmatprep.subr.bf16.mxu0 0
    %723 = vmatpush1.bf16.msra.mxu0 %v517
    %724 = vmatprep.subr.bf16.mxu0 0
    %725 = vmatpush1.bf16.msra.mxu0 %v518
    %726 = vmatprep.subr.bf16.mxu0 0
    %727 = vmatpush1.bf16.msra.mxu0 %v519
    %728 = vmatprep.subr.bf16.mxu0 0
    %729 = vmatpush1.bf16.msra.mxu0 %v520
    %730 = vmatprep.subr.bf16.mxu0 0
    %731 = vmatpush1.bf16.msra.mxu0 %v521
    %732 = vmatprep.subr.bf16.mxu0 0
    %733 = vmatpush1.bf16.msra.mxu0 %v522
    %734 = vmatprep.subr.bf16.mxu0 0
    %735 = vmatpush1.bf16.msra.mxu0 %v523
    %736 = vmatprep.subr.bf16.mxu0 0
    %737 = vmatpush1.bf16.msra.mxu0 %v524
    %738 = vmatprep.subr.bf16.mxu0 0
    %739 = vmatpush1.bf16.msra.mxu0 %v525
    %740 = vmatprep.subr.bf16.mxu0 0
    %741 = vmatpush1.bf16.msra.mxu0 %v526
    %742 = vmatprep.subr.bf16.mxu0 0
    %743 = vmatpush1.bf16.msra.mxu0 %v527
    %744 = vmatprep.mubr.bf16.mxu0 %v199
    %745 = vmatmul.mubr.bf16.gmra.mrb[0].mxu0 %v198
    %v746 = vpop.f32.mrb[0].mxu0
    %v747 = vadd.f32 %v707, %v746
    %v748 = vpop.f32.mrb[0].mxu0
    %v749 = vpop.f32.mrb[0].mxu0
    %v750 = vpop.f32.mrb[0].mxu0
    %751 = vdwg.mxu0
    %752 = vmax.xlane.f32.xlu0 %v747
    %v753 = vpop.xlane.xlu0 %752
    %v754 = vsub.f32 %v747, %v753
    %v755 = vmul.f32 %v754, 1.442695
    %v756 = vpow.pop %v755
    %757 = vadd.xlane.f32.xlu0 %v756
    %v758 = vpop.xlane.xlu0 %757
    %v759 = vlog2.pop %v758
    %v760 = vmul.f32 %v759, 0.6931472
    %v761 = vadd.f32 %v753, %v760
    %v762 = vsub.f32 0.0, %v761
    %vm763 = vcmask 7168
    %764 = vst.msk [vmem:[%s3] sm:$0xff] %vm763, %v762
    // Predicated region
    $region22: #{tpu_custom_call.1} parent=1 // pred_check
      _
    $region23: #{tpu_custom_call.1} parent=1 // pred_check_branch
      %766 = sbr.rel (0) target = $region25
    $region24: #{tpu_custom_call.1} parent=1 // pred_region
      _
    $region25: #{tpu_custom_call.1} parent=1 // pred_fallthru
      _
    // Predicated region
    $region26: #{tpu_custom_call.1} parent=1 // pred_check
      _
    $region27: #{tpu_custom_call.1} parent=1 // pred_check_branch
      %768 = sbr.rel (0) target = $region29
    $region28: #{tpu_custom_call.1} parent=1 // pred_region
      _
    $region29: #{tpu_custom_call.1} parent=1 // pred_fallthru
      _
    %769 = vsyncpa [#allocation3], 1
    %770 = vsyncpa [#allocation5], 1

</llo_original>
